<compile_context>
chip_gen: v7x
topology: tpu7x:2x2x1
jax: 0.10.0
libtpu: 0.0.40
codegen_flags: <defaults>
</compile_context>

<pallas_src>
import functools

import jax
import jax.numpy as jnp
from jax.experimental import pallas as pl
from jax.experimental.pallas import tpu as pltpu

LEAKY_ALPHA = 0.1              # opt['leakey']
COMPUTE_DTYPE = jnp.bfloat16   # MXU-native operand dtype; accumulation is f32


# ------------------------------ fused kernel -------------------------------

def _dgcn_block(adj, x, w_ref, b_ref, wrow, brow, is_user, *, h, alpha):
    """One DGCNLayer, fully in-register/VMEM.

    Weight-slab row layout for this block (each chunk is h rows, 2h lanes):
      wrow + 0h .. 1h : [W1 | W2]                 (lane-stacked gc1/gc2)
      wrow + 1h .. 2h : [W3 | W4]                 (lane-stacked gc3/gc4)
      wrow + 2h .. 3h : Wu[:h]  in lanes 0:h      (Union rows hit by after_ho)
      wrow + 3h .. 4h : Wu[h:]  in lanes 0:h      (Union rows hit by fea)
    Bias-slab rows: brow+0 = [b1|b2], brow+1 = [b3|b4], brow+2 = [bu | 0].
    """
    f32 = jnp.float32
    cdt = adj.dtype  # bf16 compute dtype

    w12 = w_ref[wrow + 0 * h: wrow + 1 * h, :]        # [h, 2h]
    w34 = w_ref[wrow + 1 * h: wrow + 2 * h, :]        # [h, 2h]
    wu_h = w_ref[wrow + 2 * h: wrow + 3 * h, :h]      # [h, h]
    wu_x = w_ref[wrow + 3 * h: wrow + 4 * h, :h]      # [h, h]
    b12 = b_ref[brow + 0: brow + 1, :]                # [1, 2h] f32
    b34 = b_ref[brow + 1: brow + 2, :]                # [1, 2h] f32
    bu = b_ref[brow + 2: brow + 3, :h]                # [1, h]  f32

    # gc1/gc2 lane-stacked: leaky_relu(adj @ (x @ [W1|W2]) + [b1|b2])
    s12 = jnp.dot(x, w12, preferred_element_type=f32)                    # [N, 2h]
    z12 = jnp.dot(adj, s12.astype(cdt), preferred_element_type=f32) + b12
    z12 = jnp.where(z12 > 0, z12, alpha * z12)
    # torch.cat((user[:Nu], item[Nu:]), 0) == per-row select between heads.
    # These half-width slices stay as in-vreg lane selects at 2h = 64 lanes;
    # fall back to pltpu.roll(z12, shift=h, axis=-1) if they ever materialize.
    after_ui = jnp.where(is_user, z12[:, :h], z12[:, h:])                # [N, h] f32

    # gc3/gc4 lane-stacked on the recombined features.
    s34 = jnp.dot(after_ui.astype(cdt), w34, preferred_element_type=f32)
    z34 = jnp.dot(adj, s34.astype(cdt), preferred_element_type=f32) + b34
    z34 = jnp.where(z34 > 0, z34, alpha * z34)
    after_ho = jnp.where(is_user, z34[:, :h], z34[:, h:])                # [N, h] f32

    # Union as split-K (no lane concat): relu(after_ho @ Wu[:h] + x @ Wu[h:] + bu)
    out = (jnp.dot(after_ho.astype(cdt), wu_h, preferred_element_type=f32)
           + jnp.dot(x, wu_x, preferred_element_type=f32)
           + bu)
    return jnp.maximum(out, 0.0)                                         # [N, h] f32


def _gnn2_kernel(adj_ref, fea_ref, w_ref, b_ref, out_ref, *, n_user, h, alpha):
    adj = adj_ref[...]            # [N, N] bf16
    fea = fea_ref[...]            # [N, D] bf16
    n = adj.shape[0]

    # Hoisted row mask: computed once, reused by both DGCN blocks.
    is_user = jax.lax.broadcasted_iota(jnp.int32, (n, h), 0) < n_user

    h1 = _dgcn_block(adj, fea, w_ref, b_ref, 0, 0, is_user, h=h, alpha=alpha)
    h2 = _dgcn_block(adj, h1.astype(adj.dtype), w_ref, b_ref, 4 * h, 3,
                     is_user, h=h, alpha=alpha)

    # Single lane-contiguous [N, H] store; user/item split happens in the
    # wrapper.  (H=32 < 128 lanes is dictated by the model; batching feature
    # groups along lanes would be needed to reach full lane occupancy.)
    out_ref[...] = h2.astype(out_ref.dtype)


# ------------------------------ parameter packing ---------------------------

def _pack_params(params, h, dtype):
    """Pack all weights into one [8h, 2h] slab + biases into one [8, 2h] slab."""
    def per_block(p):
        zeros_w = jnp.zeros((h, h), jnp.float32)
        w = jnp.concatenate([
            jnp.concatenate([p["w1"], p["w2"]], axis=1),          # [h, 2h]
            jnp.concatenate([p["w3"], p["w4"]], axis=1),          # [h, 2h]
            jnp.concatenate([p["wu"][:h], zeros_w], axis=1),      # Wu[:h] | 0
            jnp.concatenate([p["wu"][h:], zeros_w], axis=1),      # Wu[h:] | 0
        ], axis=0)                                                # [4h, 2h]
        b = jnp.stack([
            jnp.concatenate([p["b1"], p["b2"]]),                  # [2h]
            jnp.concatenate([p["b3"], p["b4"]]),                  # [2h]
            jnp.concatenate([p["bu"], jnp.zeros((h,), jnp.float32)]),
        ], axis=0)                                                # [3, 2h]
        return w, b

    wa, ba = per_block(params["dgcn1"])
    wb, bb = per_block(params["dgcn2"])
    w_slab = jnp.concatenate([wa, wb], axis=0).astype(dtype)      # [8h, 2h] bf16
    b_slab = jnp.concatenate(
        [ba, bb, jnp.zeros((2, 2 * h), jnp.float32)], axis=0
    ).astype(jnp.float32)                                         # [8, 2h] f32
    return w_slab, b_slab


# ------------------------------ model wrapper ------------------------------

def gnn2_forward(user_fea, item_fea, UV, VU, adj, params, n_user):
    # UV / VU are unused by GNN2.forward (kept for signature fidelity).
    del UV, VU
    # TODO(synk): training-mode F.dropout (stochastic) not implemented; the
    # kernel reproduces inference-mode semantics where dropout is the identity.
    fea = jnp.concatenate([user_fea, item_fea], axis=0)
    n, d = fea.shape
    h = params["dgcn1"]["wu"].shape[1]
    if d != h:
        raise ValueError(
            f"BiGI GNN2 requires feature_dim == hidden_dim (got {d} vs {h}).")

    w_slab, b_slab = _pack_params(params, h, COMPUTE_DTYPE)
    adj_c = adj.astype(COMPUTE_DTYPE)
    fea_c = fea.astype(COMPUTE_DTYPE)

    vmem = pl.BlockSpec(memory_space=pltpu.MemorySpace.VMEM)
    out = pl.pallas_call(
        functools.partial(_gnn2_kernel, n_user=n_user, h=h, alpha=LEAKY_ALPHA),
        out_shape=jax.ShapeDtypeStruct((n, h), jnp.float32),
        in_specs=[vmem, vmem, vmem, vmem],
        out_specs=vmem,
    )(adj_c, fea_c, w_slab, b_slab)

    # torch.index_select(out, 0, user_index / item_index): static row splits,
    # done on the XLA side so the kernel emits a single lane-dense output.
    return out[:n_user], out[n_user:]


# --------------------------- pure-JAX references -----------------------------

def _ref_gcn(adj, x, w, b, alpha=LEAKY_ALPHA):
    out = adj @ (x @ w) + b
    return jnp.where(out > 0, out, alpha * out)


def _ref_dgcn(fea, adj, p, n_user):
    user = _ref_gcn(adj, fea, p["w1"], p["b1"])
    item = _ref_gcn(adj, fea, p["w2"], p["b2"])
    after_ui = jnp.concatenate([user[:n_user], item[n_user:]], axis=0)
    user_ho = _ref_gcn(adj, after_ui, p["w3"], p["b3"])
    item_ho = _ref_gcn(adj, after_ui, p["w4"], p["b4"])
    after_ho = jnp.concatenate([user_ho[:n_user], item_ho[n_user:]], axis=0)
    out = jnp.concatenate([after_ho, fea], axis=1) @ p["wu"] + p["bu"]
    return jnp.maximum(out, 0.0)


def _ref_forward_f32(user_fea, item_fea, adj, params, n_user):
    """Exact (f32) reproduction of the torch module semantics."""
    fea = jnp.concatenate([user_fea, item_fea], axis=0)
    out = _ref_dgcn(fea, adj, params["dgcn1"], n_user)
    out = _ref_dgcn(out, adj, params["dgcn2"], n_user)
    return out[:n_user], out[n_user:]


def _ref_forward_matched(user_fea, item_fea, adj, params, n_user,
                         dtype=COMPUTE_DTYPE):
    """Pure-JAX reference mirroring the kernel's bf16-operand / f32-accum math."""
    f32 = jnp.float32
    fea = jnp.concatenate([user_fea, item_fea], axis=0).astype(dtype)
    adj_c = adj.astype(dtype)
    n = fea.shape[0]
    h = params["dgcn1"]["wu"].shape[1]
    is_user = jnp.arange(n)[:, None] < n_user

    def block(x, p):
        w12 = jnp.concatenate([p["w1"], p["w2"]], 1).astype(dtype)
        w34 = jnp.concatenate([p["w3"], p["w4"]], 1).astype(dtype)
        wu = p["wu"].astype(dtype)
        b12 = jnp.concatenate([p["b1"], p["b2"]])
        b34 = jnp.concatenate([p["b3"], p["b4"]])
        s12 = jnp.dot(x, w12, preferred_element_type=f32)
        z12 = jnp.dot(adj_c, s12.astype(dtype), preferred_element_type=f32) + b12
        z12 = jnp.where(z12 > 0, z12, LEAKY_ALPHA * z12)
        aui = jnp.where(is_user, z12[:, :h], z12[:, h:])
        s34 = jnp.dot(aui.astype(dtype), w34, preferred_element_type=f32)
        z34 = jnp.dot(adj_c, s34.astype(dtype), preferred_element_type=f32) + b34
        z34 = jnp.where(z34 > 0, z34, LEAKY_ALPHA * z34)
        aho = jnp.where(is_user, z34[:, :h], z34[:, h:])
        out = (jnp.dot(aho.astype(dtype), wu[:h], preferred_element_type=f32)
               + jnp.dot(x, wu[h:], preferred_element_type=f32) + p["bu"])
        return jnp.maximum(out, 0.0)

    h1 = block(fea, params["dgcn1"])
    h2 = block(h1.astype(dtype), params["dgcn2"])
    return h2[:n_user], h2[n_user:]


# ---------------------------- parameter building ---------------------------

def init_dgcn_params(key, feat_dim, hid_dim):
    ks = jax.random.split(key, 10)
    s_gcn = 1.0 / jnp.sqrt(hid_dim)
    s_un = 1.0 / jnp.sqrt(hid_dim + feat_dim)
    p = {}
    for idx in range(4):
        p[f"w{idx+1}"] = jax.random.uniform(
            ks[2 * idx], (feat_dim, hid_dim), jnp.float32, -s_gcn, s_gcn)
        p[f"b{idx+1}"] = jax.random.uniform(
            ks[2 * idx + 1], (hid_dim,), jnp.float32, -s_gcn, s_gcn)
    p["wu"] = jax.random.uniform(
        ks[8], (hid_dim + feat_dim, hid_dim), jnp.float32, -s_un, s_un)
    p["bu"] = jax.random.uniform(ks[9], (hid_dim,), jnp.float32, -s_un, s_un)
    return p


if __name__ == "__main__":
    # opt: number_user=8, number_item=8, feature_dim=hidden_dim=32,
    #      dropout=0 (inference), leakey=0.1, GNN=2
    n_user, n_item = 8, 8
    N = n_user + n_item
    feat_dim = hid_dim = 32   # must be equal (as in the original BiGI code)

    key = jax.random.PRNGKey(0)
    k_uf, k_if, k_adj, k_uv, k_vu, k_p1, k_p2 = jax.random.split(key, 7)

    user_fea = jax.random.normal(k_uf, (n_user, feat_dim), jnp.float32)
    item_fea = jax.random.normal(k_if, (n_item, feat_dim), jnp.float32)

    # dense normalized-adjacency stand-in
    raw = jax.random.uniform(k_adj, (N, N), jnp.float32)
    adj = raw / jnp.sum(raw, axis=1, keepdims=True)

    UV = jax.random.uniform(k_uv, (n_user, n_item), jnp.float32)   # unused
    VU = jax.random.uniform(k_vu, (n_item, n_user), jnp.float32)   # unused

    params = {
        "dgcn1": init_dgcn_params(k_p1, feat_dim, hid_dim),
        "dgcn2": init_dgcn_params(k_p2, feat_dim, hid_dim),
    }

    fwd = jax.jit(functools.partial(gnn2_forward, n_user=n_user))
    user_out, item_out = fwd(user_fea, item_fea, UV, VU, adj, params)
    jax.block_until_ready((user_out, item_out))

    assert user_out.shape == (n_user, hid_dim)
    assert item_out.shape == (n_item, hid_dim)

    # (1) Tight check against a pure-JAX reference doing the same bf16-operand,
    #     f32-accumulation math as the kernel.
    mu, mi = _ref_forward_matched(user_fea, item_fea, adj, params, n_user)
    assert jnp.allclose(user_out, mu, atol=1e-3, rtol=1e-3)
    assert jnp.allclose(item_out, mi, atol=1e-3, rtol=1e-3)

    # (2) Looser check against the exact f32 torch-module semantics (bounds the
    #     bf16 quantization error of the MXU-friendly compute path).
    ru, ri = _ref_forward_f32(user_fea, item_fea, adj, params, n_user)
    assert jnp.allclose(user_out, ru, atol=5e-2, rtol=5e-2)
    assert jnp.allclose(item_out, ri, atol=5e-2, rtol=5e-2)

    print("KERNEL_OK")
</pallas_src>

<mosaic_0001>
module attributes {stable_mosaic.version = 11 : i64} {
  func.func @_gnn2_kernel(%arg0: memref<16x16xbf16, #tpu.memory_space<vmem>>, %arg1: memref<16x32xbf16, #tpu.memory_space<vmem>>, %arg2: memref<256x64xbf16, #tpu.memory_space<vmem>>, %arg3: memref<8x64xf32, #tpu.memory_space<vmem>>, %arg4: memref<16x32xf32, #tpu.memory_space<vmem>>) attributes {dimension_semantics = [], scalar_prefetch = 0 : i64, scratch_operands = 0 : i64, tpu.core_type = #tpu.core_type<tc>} {
    %c0 = arith.constant 0 : index
    %c0_0 = arith.constant 0 : index
    %0 = vector.load %arg0[%c0, %c0_0] : memref<16x16xbf16, #tpu.memory_space<vmem>>, vector<16x16xbf16>
    %c0_1 = arith.constant 0 : index
    %c0_2 = arith.constant 0 : index
    %1 = vector.load %arg1[%c0_1, %c0_2] : memref<16x32xbf16, #tpu.memory_space<vmem>>, vector<16x32xbf16>
    %2 = tpu.iota {dimensions = array<i32: 0>} : vector<16x32xi32>
    %c8_i32 = arith.constant 8 : i32
    %3 = vector.broadcast %c8_i32 : i32 to vector<16x32xi32>
    %4 = arith.cmpi slt, %2, %3 : vector<16x32xi32>
    %c0_3 = arith.constant 0 : index
    %c0_4 = arith.constant 0 : index
    %5 = vector.load %arg2[%c0_3, %c0_4] : memref<256x64xbf16, #tpu.memory_space<vmem>>, vector<32x64xbf16>
    %c32 = arith.constant 32 : index
    %c0_5 = arith.constant 0 : index
    %6 = vector.load %arg2[%c32, %c0_5] : memref<256x64xbf16, #tpu.memory_space<vmem>>, vector<32x64xbf16>
    %c64 = arith.constant 64 : index
    %c0_6 = arith.constant 0 : index
    %7 = vector.load %arg2[%c64, %c0_6] : memref<256x64xbf16, #tpu.memory_space<vmem>>, vector<32x32xbf16>
    %c96 = arith.constant 96 : index
    %c0_7 = arith.constant 0 : index
    %8 = vector.load %arg2[%c96, %c0_7] : memref<256x64xbf16, #tpu.memory_space<vmem>>, vector<32x32xbf16>
    %c0_8 = arith.constant 0 : index
    %c0_9 = arith.constant 0 : index
    %9 = vector.load %arg3[%c0_8, %c0_9] : memref<8x64xf32, #tpu.memory_space<vmem>>, vector<1x64xf32>
    %c1 = arith.constant 1 : index
    %c0_10 = arith.constant 0 : index
    %10 = vector.load %arg3[%c1, %c0_10] : memref<8x64xf32, #tpu.memory_space<vmem>>, vector<1x64xf32>
    %c2 = arith.constant 2 : index
    %c0_11 = arith.constant 0 : index
    %11 = vector.load %arg3[%c2, %c0_11] : memref<8x64xf32, #tpu.memory_space<vmem>>, vector<1x32xf32>
    %cst = arith.constant dense<0.000000e+00> : vector<16x64xf32>
    %12 = tpu.matmul %1, %5, %cst {dimension_numbers = #tpu.dot_dimension_numbers<[1], [0], [0], [1], [0, 0, 1, 1], [], []>} : vector<16x32xbf16>, vector<32x64xbf16>, vector<16x64xf32> -> vector<16x64xf32>
    %13 = arith.truncf %12 : vector<16x64xf32> to vector<16x64xbf16>
    %cst_12 = arith.constant dense<0.000000e+00> : vector<16x64xf32>
    %14 = tpu.matmul %0, %13, %cst_12 {dimension_numbers = #tpu.dot_dimension_numbers<[1], [0], [0], [1], [0, 0, 1, 1], [], []>} : vector<16x16xbf16>, vector<16x64xbf16>, vector<16x64xf32> -> vector<16x64xf32>
    %15 = vector.broadcast %9 : vector<1x64xf32> to vector<16x64xf32>
    %16 = arith.addf %14, %15 : vector<16x64xf32>
    %cst_13 = arith.constant 0.000000e+00 : f32
    %17 = vector.broadcast %cst_13 : f32 to vector<16x64xf32>
    %18 = arith.cmpf ogt, %16, %17 : vector<16x64xf32>
    %cst_14 = arith.constant 1.000000e-01 : f32
    %19 = vector.broadcast %cst_14 : f32 to vector<16x64xf32>
    %20 = arith.mulf %19, %16 : vector<16x64xf32>
    %21 = arith.select %18, %16, %20 : vector<16x64xi1>, vector<16x64xf32>
    %22 = vector.extract_strided_slice %21 {offsets = [0, 0], sizes = [16, 32], strides = [1, 1]} : vector<16x64xf32> to vector<16x32xf32>
    %23 = vector.extract_strided_slice %21 {offsets = [0, 32], sizes = [16, 32], strides = [1, 1]} : vector<16x64xf32> to vector<16x32xf32>
    %24 = arith.select %4, %22, %23 : vector<16x32xi1>, vector<16x32xf32>
    %25 = arith.truncf %24 : vector<16x32xf32> to vector<16x32xbf16>
    %cst_15 = arith.constant dense<0.000000e+00> : vector<16x64xf32>
    %26 = tpu.matmul %25, %6, %cst_15 {dimension_numbers = #tpu.dot_dimension_numbers<[1], [0], [0], [1], [0, 0, 1, 1], [], []>} : vector<16x32xbf16>, vector<32x64xbf16>, vector<16x64xf32> -> vector<16x64xf32>
    %27 = arith.truncf %26 : vector<16x64xf32> to vector<16x64xbf16>
    %cst_16 = arith.constant dense<0.000000e+00> : vector<16x64xf32>
    %28 = tpu.matmul %0, %27, %cst_16 {dimension_numbers = #tpu.dot_dimension_numbers<[1], [0], [0], [1], [0, 0, 1, 1], [], []>} : vector<16x16xbf16>, vector<16x64xbf16>, vector<16x64xf32> -> vector<16x64xf32>
    %29 = vector.broadcast %10 : vector<1x64xf32> to vector<16x64xf32>
    %30 = arith.addf %28, %29 : vector<16x64xf32>
    %cst_17 = arith.constant 0.000000e+00 : f32
    %31 = vector.broadcast %cst_17 : f32 to vector<16x64xf32>
    %32 = arith.cmpf ogt, %30, %31 : vector<16x64xf32>
    %cst_18 = arith.constant 1.000000e-01 : f32
    %33 = vector.broadcast %cst_18 : f32 to vector<16x64xf32>
    %34 = arith.mulf %33, %30 : vector<16x64xf32>
    %35 = arith.select %32, %30, %34 : vector<16x64xi1>, vector<16x64xf32>
    %36 = vector.extract_strided_slice %35 {offsets = [0, 0], sizes = [16, 32], strides = [1, 1]} : vector<16x64xf32> to vector<16x32xf32>
    %37 = vector.extract_strided_slice %35 {offsets = [0, 32], sizes = [16, 32], strides = [1, 1]} : vector<16x64xf32> to vector<16x32xf32>
    %38 = arith.select %4, %36, %37 : vector<16x32xi1>, vector<16x32xf32>
    %39 = arith.truncf %38 : vector<16x32xf32> to vector<16x32xbf16>
    %cst_19 = arith.constant dense<0.000000e+00> : vector<16x32xf32>
    %40 = tpu.matmul %39, %7, %cst_19 {dimension_numbers = #tpu.dot_dimension_numbers<[1], [0], [0], [1], [0, 0, 1, 1], [], []>} : vector<16x32xbf16>, vector<32x32xbf16>, vector<16x32xf32> -> vector<16x32xf32>
    %cst_20 = arith.constant dense<0.000000e+00> : vector<16x32xf32>
    %41 = tpu.matmul %1, %8, %cst_20 {dimension_numbers = #tpu.dot_dimension_numbers<[1], [0], [0], [1], [0, 0, 1, 1], [], []>} : vector<16x32xbf16>, vector<32x32xbf16>, vector<16x32xf32> -> vector<16x32xf32>
    %42 = arith.addf %40, %41 : vector<16x32xf32>
    %43 = vector.broadcast %11 : vector<1x32xf32> to vector<16x32xf32>
    %44 = arith.addf %42, %43 : vector<16x32xf32>
    %cst_21 = arith.constant 0.000000e+00 : f32
    %45 = vector.broadcast %cst_21 : f32 to vector<16x32xf32>
    %46 = arith.maximumf %44, %45 : vector<16x32xf32>
    %47 = arith.truncf %46 : vector<16x32xf32> to vector<16x32xbf16>
    %c128 = arith.constant 128 : index
    %c0_22 = arith.constant 0 : index
    %48 = vector.load %arg2[%c128, %c0_22] : memref<256x64xbf16, #tpu.memory_space<vmem>>, vector<32x64xbf16>
    %c160 = arith.constant 160 : index
    %c0_23 = arith.constant 0 : index
    %49 = vector.load %arg2[%c160, %c0_23] : memref<256x64xbf16, #tpu.memory_space<vmem>>, vector<32x64xbf16>
    %c192 = arith.constant 192 : index
    %c0_24 = arith.constant 0 : index
    %50 = vector.load %arg2[%c192, %c0_24] : memref<256x64xbf16, #tpu.memory_space<vmem>>, vector<32x32xbf16>
    %c224 = arith.constant 224 : index
    %c0_25 = arith.constant 0 : index
    %51 = vector.load %arg2[%c224, %c0_25] : memref<256x64xbf16, #tpu.memory_space<vmem>>, vector<32x32xbf16>
    %c3 = arith.constant 3 : index
    %c0_26 = arith.constant 0 : index
    %52 = vector.load %arg3[%c3, %c0_26] : memref<8x64xf32, #tpu.memory_space<vmem>>, vector<1x64xf32>
    %c4 = arith.constant 4 : index
    %c0_27 = arith.constant 0 : index
    %53 = vector.load %arg3[%c4, %c0_27] : memref<8x64xf32, #tpu.memory_space<vmem>>, vector<1x64xf32>
    %c5 = arith.constant 5 : index
    %c0_28 = arith.constant 0 : index
    %54 = vector.load %arg3[%c5, %c0_28] : memref<8x64xf32, #tpu.memory_space<vmem>>, vector<1x32xf32>
    %cst_29 = arith.constant dense<0.000000e+00> : vector<16x64xf32>
    %55 = tpu.matmul %47, %48, %cst_29 {dimension_numbers = #tpu.dot_dimension_numbers<[1], [0], [0], [1], [0, 0, 1, 1], [], []>} : vector<16x32xbf16>, vector<32x64xbf16>, vector<16x64xf32> -> vector<16x64xf32>
    %56 = arith.truncf %55 : vector<16x64xf32> to vector<16x64xbf16>
    %cst_30 = arith.constant dense<0.000000e+00> : vector<16x64xf32>
    %57 = tpu.matmul %0, %56, %cst_30 {dimension_numbers = #tpu.dot_dimension_numbers<[1], [0], [0], [1], [0, 0, 1, 1], [], []>} : vector<16x16xbf16>, vector<16x64xbf16>, vector<16x64xf32> -> vector<16x64xf32>
    %58 = vector.broadcast %52 : vector<1x64xf32> to vector<16x64xf32>
    %59 = arith.addf %57, %58 : vector<16x64xf32>
    %cst_31 = arith.constant 0.000000e+00 : f32
    %60 = vector.broadcast %cst_31 : f32 to vector<16x64xf32>
    %61 = arith.cmpf ogt, %59, %60 : vector<16x64xf32>
    %cst_32 = arith.constant 1.000000e-01 : f32
    %62 = vector.broadcast %cst_32 : f32 to vector<16x64xf32>
    %63 = arith.mulf %62, %59 : vector<16x64xf32>
    %64 = arith.select %61, %59, %63 : vector<16x64xi1>, vector<16x64xf32>
    %65 = vector.extract_strided_slice %64 {offsets = [0, 0], sizes = [16, 32], strides = [1, 1]} : vector<16x64xf32> to vector<16x32xf32>
    %66 = vector.extract_strided_slice %64 {offsets = [0, 32], sizes = [16, 32], strides = [1, 1]} : vector<16x64xf32> to vector<16x32xf32>
    %67 = arith.select %4, %65, %66 : vector<16x32xi1>, vector<16x32xf32>
    %68 = arith.truncf %67 : vector<16x32xf32> to vector<16x32xbf16>
    %cst_33 = arith.constant dense<0.000000e+00> : vector<16x64xf32>
    %69 = tpu.matmul %68, %49, %cst_33 {dimension_numbers = #tpu.dot_dimension_numbers<[1], [0], [0], [1], [0, 0, 1, 1], [], []>} : vector<16x32xbf16>, vector<32x64xbf16>, vector<16x64xf32> -> vector<16x64xf32>
    %70 = arith.truncf %69 : vector<16x64xf32> to vector<16x64xbf16>
    %cst_34 = arith.constant dense<0.000000e+00> : vector<16x64xf32>
    %71 = tpu.matmul %0, %70, %cst_34 {dimension_numbers = #tpu.dot_dimension_numbers<[1], [0], [0], [1], [0, 0, 1, 1], [], []>} : vector<16x16xbf16>, vector<16x64xbf16>, vector<16x64xf32> -> vector<16x64xf32>
    %72 = vector.broadcast %53 : vector<1x64xf32> to vector<16x64xf32>
    %73 = arith.addf %71, %72 : vector<16x64xf32>
    %cst_35 = arith.constant 0.000000e+00 : f32
    %74 = vector.broadcast %cst_35 : f32 to vector<16x64xf32>
    %75 = arith.cmpf ogt, %73, %74 : vector<16x64xf32>
    %cst_36 = arith.constant 1.000000e-01 : f32
    %76 = vector.broadcast %cst_36 : f32 to vector<16x64xf32>
    %77 = arith.mulf %76, %73 : vector<16x64xf32>
    %78 = arith.select %75, %73, %77 : vector<16x64xi1>, vector<16x64xf32>
    %79 = vector.extract_strided_slice %78 {offsets = [0, 0], sizes = [16, 32], strides = [1, 1]} : vector<16x64xf32> to vector<16x32xf32>
    %80 = vector.extract_strided_slice %78 {offsets = [0, 32], sizes = [16, 32], strides = [1, 1]} : vector<16x64xf32> to vector<16x32xf32>
    %81 = arith.select %4, %79, %80 : vector<16x32xi1>, vector<16x32xf32>
    %82 = arith.truncf %81 : vector<16x32xf32> to vector<16x32xbf16>
    %cst_37 = arith.constant dense<0.000000e+00> : vector<16x32xf32>
    %83 = tpu.matmul %82, %50, %cst_37 {dimension_numbers = #tpu.dot_dimension_numbers<[1], [0], [0], [1], [0, 0, 1, 1], [], []>} : vector<16x32xbf16>, vector<32x32xbf16>, vector<16x32xf32> -> vector<16x32xf32>
    %cst_38 = arith.constant dense<0.000000e+00> : vector<16x32xf32>
    %84 = tpu.matmul %47, %51, %cst_38 {dimension_numbers = #tpu.dot_dimension_numbers<[1], [0], [0], [1], [0, 0, 1, 1], [], []>} : vector<16x32xbf16>, vector<32x32xbf16>, vector<16x32xf32> -> vector<16x32xf32>
    %85 = arith.addf %83, %84 : vector<16x32xf32>
    %86 = vector.broadcast %54 : vector<1x32xf32> to vector<16x32xf32>
    %87 = arith.addf %85, %86 : vector<16x32xf32>
    %cst_39 = arith.constant 0.000000e+00 : f32
    %88 = vector.broadcast %cst_39 : f32 to vector<16x32xf32>
    %89 = arith.maximumf %87, %88 : vector<16x32xf32>
    %c0_40 = arith.constant 0 : index
    %c0_41 = arith.constant 0 : index
    %90 = vector.load %arg4[%c0_40, %c0_41] : memref<16x32xf32, #tpu.memory_space<vmem>>, vector<16x32xf32>
    tpu.vector_store %arg4[%c0_40, %c0_41], %89 {strides = array<i32>} : memref<16x32xf32, #tpu.memory_space<vmem>>, vector<16x32xf32>,
    return
  }
}

</mosaic_0001>

<llo_original>
// kernel: gnn2_forward.1
$region0: #{gnn2_forward.1}
  #allocation0 [shape = 'u32[]', space=smem, size = 0x4, offset = 0x4, fixed_abs, tag = 'smem constant byte address 0x4 - core index']
  #allocation1 [shape = 'u32[144,128]{1,0:T(1,128)}', space=vmem, size = 0x12000, scoped, tag = 'internal scratch']
  %s0 = inlined_call_operand.vmem [shape: bf16[16,16], index: 0, kind: input, shape index: {}]
  %s1 = inlined_call_operand.vmem [shape: bf16[16,32], index: 1, kind: input, shape index: {}]
  %s2 = inlined_call_operand.vmem [shape: bf16[256,64], index: 2, kind: input, shape index: {}]
  %s3 = inlined_call_operand.vmem [shape: f32[8,64], index: 3, kind: input, shape index: {}]
  %s4 = inlined_call_operand.vmem [shape: f32[16,32], index: 4, kind: output, shape index: {}]
  %s5 = sld [smem:[#allocation0]]
  $region26: #{gnn2_forward.1} parent=0
    _
  %s7 = ssub.s32 1, %s5
  %s8 = scalar_select 0, %s7, %s5
  // Predicated region
  $region2: #{gnn2_forward.1} parent=0 // pred_check
    _
  $region3: #{gnn2_forward.1} parent=0 // pred_check_branch
    %10 = sbr.rel (0) target = $region5
  $region4: #{gnn2_forward.1} parent=0 // pred_region
    _
  $region5: #{gnn2_forward.1} parent=0 // pred_fallthru
    _
  // Predicated region
  $region6: #{gnn2_forward.1} parent=0 // pred_check
    _
  $region7: #{gnn2_forward.1} parent=0 // pred_check_branch
    %12 = sbr.rel (0) target = $region9
  $region8: #{gnn2_forward.1} parent=0 // pred_region
    _
  $region9: #{gnn2_forward.1} parent=0 // pred_fallthru
    _
  // Predicated region
  $region10: #{gnn2_forward.1} parent=0 // pred_check
    _
  $region11: #{gnn2_forward.1} parent=0 // pred_check_branch
    %14 = sbr.rel (0) target = $region13
  $region12: #{gnn2_forward.1} parent=0 // pred_region
    _
  $region13: #{gnn2_forward.1} parent=0 // pred_fallthru
    _
  // Predicated region
  $region14: #{gnn2_forward.1} parent=0 // pred_check
    _
  $region15: #{gnn2_forward.1} parent=0 // pred_check_branch
    %16 = sbr.rel (0) target = $region17
  $region16: #{gnn2_forward.1} parent=0 // pred_region
    _
  $region17: #{gnn2_forward.1} parent=0 // pred_fallthru
    _
  %v18 = vld [vmem:[%s0] sm:$0xf]
  %v19 = vld [vmem:[%s0 + $0x4] sm:$0xf]
  %v20 = vld [vmem:[%s1] sm:$0xf]
  %v21 = vld [vmem:[%s1 + $0x4] sm:$0xf]
  %v22 = vlaneseq
  %v23 = vshrl.u32 %v22, 7
  %v24 = vadd.s32 %v23, 8
  %vm25 = vcmp.lt.s32.totalorder %v23, 8
  %vm26 = vcmp.lt.s32.totalorder %v24, 8
  %v27 = vld [vmem:[%s2] sm:$0xf]
  %v28 = vld [vmem:[%s2 + $0x4] sm:$0xf]
  %v29 = vld [vmem:[%s2 + $0x8] sm:$0xf]
  %v30 = vld [vmem:[%s2 + $0xc] sm:$0xf]
  %v31 = vld [vmem:[%s2 + $0x10] sm:$0xf]
  %v32 = vld [vmem:[%s2 + $0x14] sm:$0xf]
  %v33 = vld [vmem:[%s2 + $0x18] sm:$0xf]
  %v34 = vld [vmem:[%s2 + $0x1c] sm:$0xf]
  %v35 = vld [vmem:[%s2 + $0x20] sm:$0xf]
  %v36 = vld [vmem:[%s2 + $0x24] sm:$0xf]
  %v37 = vld [vmem:[%s2 + $0x28] sm:$0xf]
  %v38 = vld [vmem:[%s2 + $0x2c] sm:$0xf]
  %v39 = vld [vmem:[%s2 + $0x30] sm:$0xf]
  %v40 = vld [vmem:[%s2 + $0x34] sm:$0xf]
  %v41 = vld [vmem:[%s2 + $0x38] sm:$0xf]
  %v42 = vld [vmem:[%s2 + $0x3c] sm:$0xf]
  %v43 = vld [vmem:[%s3] sm:$0x1]
  %v44 = vld [vmem:[%s3 + $0x1] sm:$0x1]
  %v45 = vld [vmem:[%s3 + $0x2] sm:$0x1]
  %v48 = vunpack.c.l.b16 %v20
  %v49 = vunpack.c.l.b16 %v21
  %v50 = vpack.c.b16 %v49, %v48
  %v55 = vunpack.c.l.b16 %v27
  %v56 = vunpack.c.l.b16 %v28
  %v57 = vunpack.c.l.b16 %v29
  %v58 = vunpack.c.l.b16 %v30
  %v59 = vpack.c.b16 %v56, %v55
  %v60 = vpack.c.b16 %v58, %v57
  %vm63 = vcmask 261120
  %v65 = vsel %vm63, %v50, 0
  %67 = vmatprep.subr.bf16.mxu0 0
  %68 = vmatpush1.bf16.msra.mxu0 %v59
  %69 = vmatprep.subr.bf16.mxu0 0
  %70 = vmatpush1.bf16.msra.mxu0 %v60
  %71 = vmatprep.subr.bf16.mxu0 0
  %72 = vmatpush1.bf16.msra.mxu0 0
  %73 = vmatprep.subr.bf16.mxu0 0
  %74 = vmatpush1.bf16.msra.mxu0 0
  %75 = vmatprep.subr.bf16.mxu0 0
  %76 = vmatpush1.bf16.msra.mxu0 0
  %77 = vmatprep.subr.bf16.mxu0 0
  %78 = vmatpush1.bf16.msra.mxu0 0
  %79 = vmatprep.subr.bf16.mxu0 0
  %80 = vmatpush1.bf16.msra.mxu0 0
  %81 = vmatprep.subr.bf16.mxu0 0
  %82 = vmatpush1.bf16.msra.mxu0 0
  %83 = vmatprep.subr.bf16.mxu0 0
  %84 = vmatpush1.bf16.msra.mxu0 0
  %85 = vmatprep.subr.bf16.mxu0 0
  %86 = vmatpush1.bf16.msra.mxu0 0
  %87 = vmatprep.subr.bf16.mxu0 0
  %88 = vmatpush1.bf16.msra.mxu0 0
  %89 = vmatprep.subr.bf16.mxu0 0
  %90 = vmatpush1.bf16.msra.mxu0 0
  %91 = vmatprep.subr.bf16.mxu0 0
  %92 = vmatpush1.bf16.msra.mxu0 0
  %93 = vmatprep.subr.bf16.mxu0 0
  %94 = vmatpush1.bf16.msra.mxu0 0
  %95 = vmatprep.subr.bf16.mxu0 0
  %96 = vmatpush1.bf16.msra.mxu0 0
  %97 = vmatprep.subr.bf16.mxu0 0
  %98 = vmatpush1.bf16.msra.mxu0 0
  %99 = vmatprep.mubr.bf16.mxu0 0
  %100 = vmatmul.mubr.bf16.gmra.mrb[0].mxu0 %v65
  %v101 = vpop.f32.mrb[0].mxu0
  %v102 = vadd.f32 0.0, %v101
  %v103 = vpop.f32.mrb[0].mxu0
  %v104 = vpop.f32.mrb[0].mxu0
  %v105 = vadd.f32 0.0, %v104
  %v106 = vpop.f32.mrb[0].mxu0
  %107 = vdwg.mxu0
  %v108 = vpack.c.bf16 %v105, %v102
  %v109 = vlaneseq
  %v110 = vshrl.u32 %v109, 7
  %v111 = vsub.s32 0, %v110
  %v112 = vrot.slane %v43, %v111
  %v115 = vunpack.c.l.b16 %v18
  %v116 = vunpack.c.l.b16 %v19
  %v117 = vpack.c.b16 %v116, %v115
  %vm118 = vcmask 130048
  %v120 = vsel %vm118, %v117, 0
  %122 = vmatprep.subr.bf16.mxu0 0
  %123 = vmatpush1.bf16.msra.mxu0 %v108
  %124 = vmatprep.subr.bf16.mxu0 0
  %125 = vmatpush1.bf16.msra.mxu0 0
  %126 = vmatprep.subr.bf16.mxu0 0
  %127 = vmatpush1.bf16.msra.mxu0 0
  %128 = vmatprep.subr.bf16.mxu0 0
  %129 = vmatpush1.bf16.msra.mxu0 0
  %130 = vmatprep.subr.bf16.mxu0 0
  %131 = vmatpush1.bf16.msra.mxu0 0
  %132 = vmatprep.subr.bf16.mxu0 0
  %133 = vmatpush1.bf16.msra.mxu0 0
  %134 = vmatprep.subr.bf16.mxu0 0
  %135 = vmatpush1.bf16.msra.mxu0 0
  %136 = vmatprep.subr.bf16.mxu0 0
  %137 = vmatpush1.bf16.msra.mxu0 0
  %138 = vmatprep.subr.bf16.mxu0 0
  %139 = vmatpush1.bf16.msra.mxu0 0
  %140 = vmatprep.subr.bf16.mxu0 0
  %141 = vmatpush1.bf16.msra.mxu0 0
  %142 = vmatprep.subr.bf16.mxu0 0
  %143 = vmatpush1.bf16.msra.mxu0 0
  %144 = vmatprep.subr.bf16.mxu0 0
  %145 = vmatpush1.bf16.msra.mxu0 0
  %146 = vmatprep.subr.bf16.mxu0 0
  %147 = vmatpush1.bf16.msra.mxu0 0
  %148 = vmatprep.subr.bf16.mxu0 0
  %149 = vmatpush1.bf16.msra.mxu0 0
  %150 = vmatprep.subr.bf16.mxu0 0
  %151 = vmatpush1.bf16.msra.mxu0 0
  %152 = vmatprep.subr.bf16.mxu0 0
  %153 = vmatpush1.bf16.msra.mxu0 0
  %154 = vmatprep.mubr.bf16.mxu0 0
  %155 = vmatmul.mubr.bf16.gmra.mrb[0].mxu0 %v120
  %v156 = vpop.f32.mrb[0].mxu0
  %v157 = vadd.f32 %v112, %v156
  %v158 = vpop.f32.mrb[0].mxu0
  %v159 = vpop.f32.mrb[0].mxu0
  %v160 = vadd.f32 %v112, %v159
  %v161 = vpop.f32.mrb[0].mxu0
  %162 = vdwg.mxu0
  %vm163 = vcmp.gt.f32.partialorder %v157, 0.0
  %vm164 = vcmp.gt.f32.partialorder %v160, 0.0
  %v165 = vmul.f32 %v157, 0.1
  %v166 = vmul.f32 %v160, 0.1
  %v167 = vsel %vm163, %v157, %v165
  %v168 = vsel %vm164, %v160, %v166
  %171 = vrot.lane.b32.xlu0 %v167, 96
  %v172 = vpop.permute.xlu0 %171
  %173 = vrot.lane.b32.xlu0 %v168, 96
  %v174 = vpop.permute.xlu0 %173
  %v177 = vsel %vm25, %v167, %v172
  %v178 = vsel %vm26, %v168, %v174
  %v179 = vpack.c.bf16 %v178, %v177
  %v184 = vunpack.c.l.b16 %v31
  %v185 = vunpack.c.l.b16 %v32
  %v186 = vunpack.c.l.b16 %v33
  %v187 = vunpack.c.l.b16 %v34
  %v188 = vpack.c.b16 %v185, %v184
  %v189 = vpack.c.b16 %v187, %v186
  %v193 = vsel %vm63, %v179, 0
  %195 = vmatprep.subr.bf16.mxu0 0
  %196 = vmatpush1.bf16.msra.mxu0 %v188
  %197 = vmatprep.subr.bf16.mxu0 0
  %198 = vmatpush1.bf16.msra.mxu0 %v189
  %199 = vmatprep.subr.bf16.mxu0 0
  %200 = vmatpush1.bf16.msra.mxu0 0
  %201 = vmatprep.subr.bf16.mxu0 0
  %202 = vmatpush1.bf16.msra.mxu0 0
  %203 = vmatprep.subr.bf16.mxu0 0
  %204 = vmatpush1.bf16.msra.mxu0 0
  %205 = vmatprep.subr.bf16.mxu0 0
  %206 = vmatpush1.bf16.msra.mxu0 0
  %207 = vmatprep.subr.bf16.mxu0 0
  %208 = vmatpush1.bf16.msra.mxu0 0
  %209 = vmatprep.subr.bf16.mxu0 0
  %210 = vmatpush1.bf16.msra.mxu0 0
  %211 = vmatprep.subr.bf16.mxu0 0
  %212 = vmatpush1.bf16.msra.mxu0 0
  %213 = vmatprep.subr.bf16.mxu0 0
  %214 = vmatpush1.bf16.msra.mxu0 0
  %215 = vmatprep.subr.bf16.mxu0 0
  %216 = vmatpush1.bf16.msra.mxu0 0
  %217 = vmatprep.subr.bf16.mxu0 0
  %218 = vmatpush1.bf16.msra.mxu0 0
  %219 = vmatprep.subr.bf16.mxu0 0
  %220 = vmatpush1.bf16.msra.mxu0 0
  %221 = vmatprep.subr.bf16.mxu0 0
  %222 = vmatpush1.bf16.msra.mxu0 0
  %223 = vmatprep.subr.bf16.mxu0 0
  %224 = vmatpush1.bf16.msra.mxu0 0
  %225 = vmatprep.subr.bf16.mxu0 0
  %226 = vmatpush1.bf16.msra.mxu0 0
  %227 = vmatprep.mubr.bf16.mxu0 0
  %228 = vmatmul.mubr.bf16.gmra.mrb[0].mxu0 %v193
  %v229 = vpop.f32.mrb[0].mxu0
  %v230 = vadd.f32 0.0, %v229
  %v231 = vpop.f32.mrb[0].mxu0
  %v232 = vpop.f32.mrb[0].mxu0
  %v233 = vadd.f32 0.0, %v232
  %v234 = vpop.f32.mrb[0].mxu0
  %235 = vdwg.mxu0
  %v236 = vpack.c.bf16 %v233, %v230
  %v237 = vlaneseq
  %v238 = vshrl.u32 %v237, 7
  %v239 = vsub.s32 0, %v238
  %v240 = vrot.slane %v44, %v239
  %241 = vmatprep.subr.bf16.mxu0 0
  %242 = vmatpush1.bf16.msra.mxu0 %v236
  %243 = vmatprep.subr.bf16.mxu0 0
  %244 = vmatpush1.bf16.msra.mxu0 0
  %245 = vmatprep.subr.bf16.mxu0 0
  %246 = vmatpush1.bf16.msra.mxu0 0
  %247 = vmatprep.subr.bf16.mxu0 0
  %248 = vmatpush1.bf16.msra.mxu0 0
  %249 = vmatprep.subr.bf16.mxu0 0
  %250 = vmatpush1.bf16.msra.mxu0 0
  %251 = vmatprep.subr.bf16.mxu0 0
  %252 = vmatpush1.bf16.msra.mxu0 0
  %253 = vmatprep.subr.bf16.mxu0 0
  %254 = vmatpush1.bf16.msra.mxu0 0
  %255 = vmatprep.subr.bf16.mxu0 0
  %256 = vmatpush1.bf16.msra.mxu0 0
  %257 = vmatprep.subr.bf16.mxu0 0
  %258 = vmatpush1.bf16.msra.mxu0 0
  %259 = vmatprep.subr.bf16.mxu0 0
  %260 = vmatpush1.bf16.msra.mxu0 0
  %261 = vmatprep.subr.bf16.mxu0 0
  %262 = vmatpush1.bf16.msra.mxu0 0
  %263 = vmatprep.subr.bf16.mxu0 0
  %264 = vmatpush1.bf16.msra.mxu0 0
  %265 = vmatprep.subr.bf16.mxu0 0
  %266 = vmatpush1.bf16.msra.mxu0 0
  %267 = vmatprep.subr.bf16.mxu0 0
  %268 = vmatpush1.bf16.msra.mxu0 0
  %269 = vmatprep.subr.bf16.mxu0 0
  %270 = vmatpush1.bf16.msra.mxu0 0
  %271 = vmatprep.subr.bf16.mxu0 0
  %272 = vmatpush1.bf16.msra.mxu0 0
  %273 = vmatprep.mubr.bf16.mxu0 0
  %274 = vmatmul.mubr.bf16.gmra.mrb[0].mxu0 %v120
  %v275 = vpop.f32.mrb[0].mxu0
  %v276 = vadd.f32 %v240, %v275
  %v277 = vpop.f32.mrb[0].mxu0
  %v278 = vpop.f32.mrb[0].mxu0
  %v279 = vadd.f32 %v240, %v278
  %v280 = vpop.f32.mrb[0].mxu0
  %281 = vdwg.mxu0
  %vm282 = vcmp.gt.f32.partialorder %v276, 0.0
  %vm283 = vcmp.gt.f32.partialorder %v279, 0.0
  %v284 = vmul.f32 %v276, 0.1
  %v285 = vmul.f32 %v279, 0.1
  %v286 = vsel %vm282, %v276, %v284
  %v287 = vsel %vm283, %v279, %v285
  %290 = vrot.lane.b32.xlu0 %v286, 96
  %v291 = vpop.permute.xlu0 %290
  %292 = vrot.lane.b32.xlu0 %v287, 96
  %v293 = vpop.permute.xlu0 %292
  %v296 = vsel %vm25, %v286, %v291
  %v297 = vsel %vm26, %v287, %v293
  %v298 = vpack.c.bf16 %v297, %v296
  %v303 = vunpack.c.l.b16 %v39
  %v304 = vunpack.c.l.b16 %v40
  %v305 = vunpack.c.l.b16 %v41
  %v306 = vunpack.c.l.b16 %v42
  %v307 = vpack.c.b16 %v304, %v303
  %v308 = vpack.c.b16 %v306, %v305
  %311 = vmatprep.subr.bf16.mxu0 0
  %312 = vmatpush1.bf16.msra.mxu0 %v307
  %313 = vmatprep.subr.bf16.mxu0 0
  %314 = vmatpush1.bf16.msra.mxu0 %v308
  %315 = vmatprep.subr.bf16.mxu0 0
  %316 = vmatpush1.bf16.msra.mxu0 0
  %317 = vmatprep.subr.bf16.mxu0 0
  %318 = vmatpush1.bf16.msra.mxu0 0
  %319 = vmatprep.subr.bf16.mxu0 0
  %320 = vmatpush1.bf16.msra.mxu0 0
  %321 = vmatprep.subr.bf16.mxu0 0
  %322 = vmatpush1.bf16.msra.mxu0 0
  %323 = vmatprep.subr.bf16.mxu0 0
  %324 = vmatpush1.bf16.msra.mxu0 0
  %325 = vmatprep.subr.bf16.mxu0 0
  %326 = vmatpush1.bf16.msra.mxu0 0
  %327 = vmatprep.subr.bf16.mxu0 0
  %328 = vmatpush1.bf16.msra.mxu0 0
  %329 = vmatprep.subr.bf16.mxu0 0
  %330 = vmatpush1.bf16.msra.mxu0 0
  %331 = vmatprep.subr.bf16.mxu0 0
  %332 = vmatpush1.bf16.msra.mxu0 0
  %333 = vmatprep.subr.bf16.mxu0 0
  %334 = vmatpush1.bf16.msra.mxu0 0
  %335 = vmatprep.subr.bf16.mxu0 0
  %336 = vmatpush1.bf16.msra.mxu0 0
  %337 = vmatprep.subr.bf16.mxu0 0
  %338 = vmatpush1.bf16.msra.mxu0 0
  %339 = vmatprep.subr.bf16.mxu0 0
  %340 = vmatpush1.bf16.msra.mxu0 0
  %341 = vmatprep.subr.bf16.mxu0 0
  %342 = vmatpush1.bf16.msra.mxu0 0
  %343 = vmatprep.mubr.bf16.mxu0 0
  %344 = vmatmul.mubr.bf16.gmra.mrb[0].mxu0 %v65
  %v345 = vpop.f32.mrb[0].mxu0
  %v346 = vadd.f32 0.0, %v345
  %v347 = vpop.f32.mrb[0].mxu0
  %v348 = vpop.f32.mrb[0].mxu0
  %v349 = vadd.f32 0.0, %v348
  %v350 = vpop.f32.mrb[0].mxu0
  %351 = vdwg.mxu0
  %v356 = vunpack.c.l.b16 %v35
  %v357 = vunpack.c.l.b16 %v36
  %v358 = vunpack.c.l.b16 %v37
  %v359 = vunpack.c.l.b16 %v38
  %v360 = vpack.c.b16 %v357, %v356
  %v361 = vpack.c.b16 %v359, %v358
  %v365 = vsel %vm63, %v298, 0
  %367 = vmatprep.subr.bf16.mxu0 0
  %368 = vmatpush1.bf16.msra.mxu0 %v360
  %369 = vmatprep.subr.bf16.mxu0 0
  %370 = vmatpush1.bf16.msra.mxu0 %v361
  %371 = vmatprep.subr.bf16.mxu0 0
  %372 = vmatpush1.bf16.msra.mxu0 0
  %373 = vmatprep.subr.bf16.mxu0 0
  %374 = vmatpush1.bf16.msra.mxu0 0
  %375 = vmatprep.subr.bf16.mxu0 0
  %376 = vmatpush1.bf16.msra.mxu0 0
  %377 = vmatprep.subr.bf16.mxu0 0
  %378 = vmatpush1.bf16.msra.mxu0 0
  %379 = vmatprep.subr.bf16.mxu0 0
  %380 = vmatpush1.bf16.msra.mxu0 0
  %381 = vmatprep.subr.bf16.mxu0 0
  %382 = vmatpush1.bf16.msra.mxu0 0
  %383 = vmatprep.subr.bf16.mxu0 0
  %384 = vmatpush1.bf16.msra.mxu0 0
  %385 = vmatprep.subr.bf16.mxu0 0
  %386 = vmatpush1.bf16.msra.mxu0 0
  %387 = vmatprep.subr.bf16.mxu0 0
  %388 = vmatpush1.bf16.msra.mxu0 0
  %389 = vmatprep.subr.bf16.mxu0 0
  %390 = vmatpush1.bf16.msra.mxu0 0
  %391 = vmatprep.subr.bf16.mxu0 0
  %392 = vmatpush1.bf16.msra.mxu0 0
  %393 = vmatprep.subr.bf16.mxu0 0
  %394 = vmatpush1.bf16.msra.mxu0 0
  %395 = vmatprep.subr.bf16.mxu0 0
  %396 = vmatpush1.bf16.msra.mxu0 0
  %397 = vmatprep.subr.bf16.mxu0 0
  %398 = vmatpush1.bf16.msra.mxu0 0
  %399 = vmatprep.mubr.bf16.mxu0 0
  %400 = vmatmul.mubr.bf16.gmra.mrb[0].mxu0 %v365
  %v401 = vpop.f32.mrb[0].mxu0
  %v402 = vadd.f32 %v346, %v401
  %v403 = vpop.f32.mrb[0].mxu0
  %v404 = vpop.f32.mrb[0].mxu0
  %v405 = vadd.f32 %v349, %v404
  %v406 = vpop.f32.mrb[0].mxu0
  %407 = vdwg.mxu0
  %v408 = vlaneseq
  %v409 = vshrl.u32 %v408, 7
  %v410 = vsub.s32 0, %v409
  %v411 = vrot.slane %v45, %v410
  %v412 = vadd.f32 %v402, %v411
  %v413 = vadd.f32 %v405, %v411
  %v414 = vmax.f32 %v412, 0.0
  %v415 = vmax.f32 %v413, 0.0
  %v416 = vpack.c.bf16 %v415, %v414
  %v417 = vld [vmem:[%s2 + $0x40] sm:$0xf]
  %v418 = vld [vmem:[%s2 + $0x44] sm:$0xf]
  %v419 = vld [vmem:[%s2 + $0x48] sm:$0xf]
  %v420 = vld [vmem:[%s2 + $0x4c] sm:$0xf]
  %v421 = vld [vmem:[%s2 + $0x50] sm:$0xf]
  %v422 = vld [vmem:[%s2 + $0x54] sm:$0xf]
  %v423 = vld [vmem:[%s2 + $0x58] sm:$0xf]
  %v424 = vld [vmem:[%s2 + $0x5c] sm:$0xf]
  %v425 = vld [vmem:[%s2 + $0x60] sm:$0xf]
  %v426 = vld [vmem:[%s2 + $0x64] sm:$0xf]
  %v427 = vld [vmem:[%s2 + $0x68] sm:$0xf]
  %v428 = vld [vmem:[%s2 + $0x6c] sm:$0xf]
  %v429 = vld [vmem:[%s2 + $0x70] sm:$0xf]
  %v430 = vld [vmem:[%s2 + $0x74] sm:$0xf]
  %v431 = vld [vmem:[%s2 + $0x78] sm:$0xf]
  %v432 = vld [vmem:[%s2 + $0x7c] sm:$0xf]
  %v433 = vld [vmem:[%s3 + $0x3] sm:$0x1]
  %v434 = vld [vmem:[%s3 + $0x4] sm:$0x1]
  %v435 = vld [vmem:[%s3 + $0x5] sm:$0x1]
  %v440 = vunpack.c.l.b16 %v417
  %v441 = vunpack.c.l.b16 %v418
  %v442 = vunpack.c.l.b16 %v419
  %v443 = vunpack.c.l.b16 %v420
  %v444 = vpack.c.b16 %v441, %v440
  %v445 = vpack.c.b16 %v443, %v442
  %v449 = vsel %vm63, %v416, 0
  %451 = vmatprep.subr.bf16.mxu0 0
  %452 = vmatpush1.bf16.msra.mxu0 %v444
  %453 = vmatprep.subr.bf16.mxu0 0
  %454 = vmatpush1.bf16.msra.mxu0 %v445
  %455 = vmatprep.subr.bf16.mxu0 0
  %456 = vmatpush1.bf16.msra.mxu0 0
  %457 = vmatprep.subr.bf16.mxu0 0
  %458 = vmatpush1.bf16.msra.mxu0 0
  %459 = vmatprep.subr.bf16.mxu0 0
  %460 = vmatpush1.bf16.msra.mxu0 0
  %461 = vmatprep.subr.bf16.mxu0 0
  %462 = vmatpush1.bf16.msra.mxu0 0
  %463 = vmatprep.subr.bf16.mxu0 0
  %464 = vmatpush1.bf16.msra.mxu0 0
  %465 = vmatprep.subr.bf16.mxu0 0
  %466 = vmatpush1.bf16.msra.mxu0 0
  %467 = vmatprep.subr.bf16.mxu0 0
  %468 = vmatpush1.bf16.msra.mxu0 0
  %469 = vmatprep.subr.bf16.mxu0 0
  %470 = vmatpush1.bf16.msra.mxu0 0
  %471 = vmatprep.subr.bf16.mxu0 0
  %472 = vmatpush1.bf16.msra.mxu0 0
  %473 = vmatprep.subr.bf16.mxu0 0
  %474 = vmatpush1.bf16.msra.mxu0 0
  %475 = vmatprep.subr.bf16.mxu0 0
  %476 = vmatpush1.bf16.msra.mxu0 0
  %477 = vmatprep.subr.bf16.mxu0 0
  %478 = vmatpush1.bf16.msra.mxu0 0
  %479 = vmatprep.subr.bf16.mxu0 0
  %480 = vmatpush1.bf16.msra.mxu0 0
  %481 = vmatprep.subr.bf16.mxu0 0
  %482 = vmatpush1.bf16.msra.mxu0 0
  %483 = vmatprep.mubr.bf16.mxu0 0
  %484 = vmatmul.mubr.bf16.gmra.mrb[0].mxu0 %v449
  %v485 = vpop.f32.mrb[0].mxu0
  %v486 = vadd.f32 0.0, %v485
  %v487 = vpop.f32.mrb[0].mxu0
  %v488 = vpop.f32.mrb[0].mxu0
  %v489 = vadd.f32 0.0, %v488
  %v490 = vpop.f32.mrb[0].mxu0
  %491 = vdwg.mxu0
  %v492 = vpack.c.bf16 %v489, %v486
  %v493 = vlaneseq
  %v494 = vshrl.u32 %v493, 7
  %v495 = vsub.s32 0, %v494
  %v496 = vrot.slane %v433, %v495
  %497 = vmatprep.subr.bf16.mxu0 0
  %498 = vmatpush1.bf16.msra.mxu0 %v492
  %499 = vmatprep.subr.bf16.mxu0 0
  %500 = vmatpush1.bf16.msra.mxu0 0
  %501 = vmatprep.subr.bf16.mxu0 0
  %502 = vmatpush1.bf16.msra.mxu0 0
  %503 = vmatprep.subr.bf16.mxu0 0
  %504 = vmatpush1.bf16.msra.mxu0 0
  %505 = vmatprep.subr.bf16.mxu0 0
  %506 = vmatpush1.bf16.msra.mxu0 0
  %507 = vmatprep.subr.bf16.mxu0 0
  %508 = vmatpush1.bf16.msra.mxu0 0
  %509 = vmatprep.subr.bf16.mxu0 0
  %510 = vmatpush1.bf16.msra.mxu0 0
  %511 = vmatprep.subr.bf16.mxu0 0
  %512 = vmatpush1.bf16.msra.mxu0 0
  %513 = vmatprep.subr.bf16.mxu0 0
  %514 = vmatpush1.bf16.msra.mxu0 0
  %515 = vmatprep.subr.bf16.mxu0 0
  %516 = vmatpush1.bf16.msra.mxu0 0
  %517 = vmatprep.subr.bf16.mxu0 0
  %518 = vmatpush1.bf16.msra.mxu0 0
  %519 = vmatprep.subr.bf16.mxu0 0
  %520 = vmatpush1.bf16.msra.mxu0 0
  %521 = vmatprep.subr.bf16.mxu0 0
  %522 = vmatpush1.bf16.msra.mxu0 0
  %523 = vmatprep.subr.bf16.mxu0 0
  %524 = vmatpush1.bf16.msra.mxu0 0
  %525 = vmatprep.subr.bf16.mxu0 0
  %526 = vmatpush1.bf16.msra.mxu0 0
  %527 = vmatprep.subr.bf16.mxu0 0
  %528 = vmatpush1.bf16.msra.mxu0 0
  %529 = vmatprep.mubr.bf16.mxu0 0
  %530 = vmatmul.mubr.bf16.gmra.mrb[0].mxu0 %v120
  %v531 = vpop.f32.mrb[0].mxu0
  %v532 = vadd.f32 %v496, %v531
  %v533 = vpop.f32.mrb[0].mxu0
  %v534 = vpop.f32.mrb[0].mxu0
  %v535 = vadd.f32 %v496, %v534
  %v536 = vpop.f32.mrb[0].mxu0
  %537 = vdwg.mxu0
  %vm538 = vcmp.gt.f32.partialorder %v532, 0.0
  %vm539 = vcmp.gt.f32.partialorder %v535, 0.0
  %v540 = vmul.f32 %v532, 0.1
  %v541 = vmul.f32 %v535, 0.1
  %v542 = vsel %vm538, %v532, %v540
  %v543 = vsel %vm539, %v535, %v541
  %546 = vrot.lane.b32.xlu0 %v542, 96
  %v547 = vpop.permute.xlu0 %546
  %548 = vrot.lane.b32.xlu0 %v543, 96
  %v549 = vpop.permute.xlu0 %548
  %v552 = vsel %vm25, %v542, %v547
  %v553 = vsel %vm26, %v543, %v549
  %v554 = vpack.c.bf16 %v553, %v552
  %v559 = vunpack.c.l.b16 %v421
  %v560 = vunpack.c.l.b16 %v422
  %v561 = vunpack.c.l.b16 %v423
  %v562 = vunpack.c.l.b16 %v424
  %v563 = vpack.c.b16 %v560, %v559
  %v564 = vpack.c.b16 %v562, %v561
  %v568 = vsel %vm63, %v554, 0
  %570 = vmatprep.subr.bf16.mxu0 0
  %571 = vmatpush1.bf16.msra.mxu0 %v563
  %572 = vmatprep.subr.bf16.mxu0 0
  %573 = vmatpush1.bf16.msra.mxu0 %v564
  %574 = vmatprep.subr.bf16.mxu0 0
  %575 = vmatpush1.bf16.msra.mxu0 0
  %576 = vmatprep.subr.bf16.mxu0 0
  %577 = vmatpush1.bf16.msra.mxu0 0
  %578 = vmatprep.subr.bf16.mxu0 0
  %579 = vmatpush1.bf16.msra.mxu0 0
  %580 = vmatprep.subr.bf16.mxu0 0
  %581 = vmatpush1.bf16.msra.mxu0 0
  %582 = vmatprep.subr.bf16.mxu0 0
  %583 = vmatpush1.bf16.msra.mxu0 0
  %584 = vmatprep.subr.bf16.mxu0 0
  %585 = vmatpush1.bf16.msra.mxu0 0
  %586 = vmatprep.subr.bf16.mxu0 0
  %587 = vmatpush1.bf16.msra.mxu0 0
  %588 = vmatprep.subr.bf16.mxu0 0
  %589 = vmatpush1.bf16.msra.mxu0 0
  %590 = vmatprep.subr.bf16.mxu0 0
  %591 = vmatpush1.bf16.msra.mxu0 0
  %592 = vmatprep.subr.bf16.mxu0 0
  %593 = vmatpush1.bf16.msra.mxu0 0
  %594 = vmatprep.subr.bf16.mxu0 0
  %595 = vmatpush1.bf16.msra.mxu0 0
  %596 = vmatprep.subr.bf16.mxu0 0
  %597 = vmatpush1.bf16.msra.mxu0 0
  %598 = vmatprep.subr.bf16.mxu0 0
  %599 = vmatpush1.bf16.msra.mxu0 0
  %600 = vmatprep.subr.bf16.mxu0 0
  %601 = vmatpush1.bf16.msra.mxu0 0
  %602 = vmatprep.mubr.bf16.mxu0 0
  %603 = vmatmul.mubr.bf16.gmra.mrb[0].mxu0 %v568
  %v604 = vpop.f32.mrb[0].mxu0
  %v605 = vadd.f32 0.0, %v604
  %v606 = vpop.f32.mrb[0].mxu0
  %v607 = vpop.f32.mrb[0].mxu0
  %v608 = vadd.f32 0.0, %v607
  %v609 = vpop.f32.mrb[0].mxu0
  %610 = vdwg.mxu0
  %v611 = vpack.c.bf16 %v608, %v605
  %v612 = vlaneseq
  %v613 = vshrl.u32 %v612, 7
  %v614 = vsub.s32 0, %v613
  %v615 = vrot.slane %v434, %v614
  %616 = vmatprep.subr.bf16.mxu0 0
  %617 = vmatpush1.bf16.msra.mxu0 %v611
  %618 = vmatprep.subr.bf16.mxu0 0
  %619 = vmatpush1.bf16.msra.mxu0 0
  %620 = vmatprep.subr.bf16.mxu0 0
  %621 = vmatpush1.bf16.msra.mxu0 0
  %622 = vmatprep.subr.bf16.mxu0 0
  %623 = vmatpush1.bf16.msra.mxu0 0
  %624 = vmatprep.subr.bf16.mxu0 0
  %625 = vmatpush1.bf16.msra.mxu0 0
  %626 = vmatprep.subr.bf16.mxu0 0
  %627 = vmatpush1.bf16.msra.mxu0 0
  %628 = vmatprep.subr.bf16.mxu0 0
  %629 = vmatpush1.bf16.msra.mxu0 0
  %630 = vmatprep.subr.bf16.mxu0 0
  %631 = vmatpush1.bf16.msra.mxu0 0
  %632 = vmatprep.subr.bf16.mxu0 0
  %633 = vmatpush1.bf16.msra.mxu0 0
  %634 = vmatprep.subr.bf16.mxu0 0
  %635 = vmatpush1.bf16.msra.mxu0 0
  %636 = vmatprep.subr.bf16.mxu0 0
  %637 = vmatpush1.bf16.msra.mxu0 0
  %638 = vmatprep.subr.bf16.mxu0 0
  %639 = vmatpush1.bf16.msra.mxu0 0
  %640 = vmatprep.subr.bf16.mxu0 0
  %641 = vmatpush1.bf16.msra.mxu0 0
  %642 = vmatprep.subr.bf16.mxu0 0
  %643 = vmatpush1.bf16.msra.mxu0 0
  %644 = vmatprep.subr.bf16.mxu0 0
  %645 = vmatpush1.bf16.msra.mxu0 0
  %646 = vmatprep.subr.bf16.mxu0 0
  %647 = vmatpush1.bf16.msra.mxu0 0
  %648 = vmatprep.mubr.bf16.mxu0 0
  %649 = vmatmul.mubr.bf16.gmra.mrb[0].mxu0 %v120
  %v650 = vpop.f32.mrb[0].mxu0
  %v651 = vadd.f32 %v615, %v650
  %v652 = vpop.f32.mrb[0].mxu0
  %v653 = vpop.f32.mrb[0].mxu0
  %v654 = vadd.f32 %v615, %v653
  %v655 = vpop.f32.mrb[0].mxu0
  %656 = vdwg.mxu0
  %vm657 = vcmp.gt.f32.partialorder %v651, 0.0
  %vm658 = vcmp.gt.f32.partialorder %v654, 0.0
  %v659 = vmul.f32 %v651, 0.1
  %v660 = vmul.f32 %v654, 0.1
  %v661 = vsel %vm657, %v651, %v659
  %v662 = vsel %vm658, %v654, %v660
  %665 = vrot.lane.b32.xlu0 %v661, 96
  %v666 = vpop.permute.xlu0 %665
  %667 = vrot.lane.b32.xlu0 %v662, 96
  %v668 = vpop.permute.xlu0 %667
  %v671 = vsel %vm25, %v661, %v666
  %v672 = vsel %vm26, %v662, %v668
  %v673 = vpack.c.bf16 %v672, %v671
  %v678 = vunpack.c.l.b16 %v429
  %v679 = vunpack.c.l.b16 %v430
  %v680 = vunpack.c.l.b16 %v431
  %v681 = vunpack.c.l.b16 %v432
  %v682 = vpack.c.b16 %v679, %v678
  %v683 = vpack.c.b16 %v681, %v680
  %686 = vmatprep.subr.bf16.mxu0 0
  %687 = vmatpush1.bf16.msra.mxu0 %v682
  %688 = vmatprep.subr.bf16.mxu0 0
  %689 = vmatpush1.bf16.msra.mxu0 %v683
  %690 = vmatprep.subr.bf16.mxu0 0
  %691 = vmatpush1.bf16.msra.mxu0 0
  %692 = vmatprep.subr.bf16.mxu0 0
  %693 = vmatpush1.bf16.msra.mxu0 0
  %694 = vmatprep.subr.bf16.mxu0 0
  %695 = vmatpush1.bf16.msra.mxu0 0
  %696 = vmatprep.subr.bf16.mxu0 0
  %697 = vmatpush1.bf16.msra.mxu0 0
  %698 = vmatprep.subr.bf16.mxu0 0
  %699 = vmatpush1.bf16.msra.mxu0 0
  %700 = vmatprep.subr.bf16.mxu0 0
  %701 = vmatpush1.bf16.msra.mxu0 0
  %702 = vmatprep.subr.bf16.mxu0 0
  %703 = vmatpush1.bf16.msra.mxu0 0
  %704 = vmatprep.subr.bf16.mxu0 0
  %705 = vmatpush1.bf16.msra.mxu0 0
  %706 = vmatprep.subr.bf16.mxu0 0
  %707 = vmatpush1.bf16.msra.mxu0 0
  %708 = vmatprep.subr.bf16.mxu0 0
  %709 = vmatpush1.bf16.msra.mxu0 0
  %710 = vmatprep.subr.bf16.mxu0 0
  %711 = vmatpush1.bf16.msra.mxu0 0
  %712 = vmatprep.subr.bf16.mxu0 0
  %713 = vmatpush1.bf16.msra.mxu0 0
  %714 = vmatprep.subr.bf16.mxu0 0
  %715 = vmatpush1.bf16.msra.mxu0 0
  %716 = vmatprep.subr.bf16.mxu0 0
  %717 = vmatpush1.bf16.msra.mxu0 0
  %718 = vmatprep.mubr.bf16.mxu0 0
  %719 = vmatmul.mubr.bf16.gmra.mrb[0].mxu0 %v449
  %v720 = vpop.f32.mrb[0].mxu0
  %v721 = vadd.f32 0.0, %v720
  %v722 = vpop.f32.mrb[0].mxu0
  %v723 = vpop.f32.mrb[0].mxu0
  %v724 = vadd.f32 0.0, %v723
  %v725 = vpop.f32.mrb[0].mxu0
  %726 = vdwg.mxu0
  %v731 = vunpack.c.l.b16 %v425
  %v732 = vunpack.c.l.b16 %v426
  %v733 = vunpack.c.l.b16 %v427
  %v734 = vunpack.c.l.b16 %v428
  %v735 = vpack.c.b16 %v732, %v731
  %v736 = vpack.c.b16 %v734, %v733
  %v740 = vsel %vm63, %v673, 0
  %742 = vmatprep.subr.bf16.mxu0 0
  %743 = vmatpush1.bf16.msra.mxu0 %v735
  %744 = vmatprep.subr.bf16.mxu0 0
  %745 = vmatpush1.bf16.msra.mxu0 %v736
  %746 = vmatprep.subr.bf16.mxu0 0
  %747 = vmatpush1.bf16.msra.mxu0 0
  %748 = vmatprep.subr.bf16.mxu0 0
  %749 = vmatpush1.bf16.msra.mxu0 0
  %750 = vmatprep.subr.bf16.mxu0 0
  %751 = vmatpush1.bf16.msra.mxu0 0
  %752 = vmatprep.subr.bf16.mxu0 0
  %753 = vmatpush1.bf16.msra.mxu0 0
  %754 = vmatprep.subr.bf16.mxu0 0
  %755 = vmatpush1.bf16.msra.mxu0 0
  %756 = vmatprep.subr.bf16.mxu0 0
  %757 = vmatpush1.bf16.msra.mxu0 0
  %758 = vmatprep.subr.bf16.mxu0 0
  %759 = vmatpush1.bf16.msra.mxu0 0
  %760 = vmatprep.subr.bf16.mxu0 0
  %761 = vmatpush1.bf16.msra.mxu0 0
  %762 = vmatprep.subr.bf16.mxu0 0
  %763 = vmatpush1.bf16.msra.mxu0 0
  %764 = vmatprep.subr.bf16.mxu0 0
  %765 = vmatpush1.bf16.msra.mxu0 0
  %766 = vmatprep.subr.bf16.mxu0 0
  %767 = vmatpush1.bf16.msra.mxu0 0
  %768 = vmatprep.subr.bf16.mxu0 0
  %769 = vmatpush1.bf16.msra.mxu0 0
  %770 = vmatprep.subr.bf16.mxu0 0
  %771 = vmatpush1.bf16.msra.mxu0 0
  %772 = vmatprep.subr.bf16.mxu0 0
  %773 = vmatpush1.bf16.msra.mxu0 0
  %774 = vmatprep.mubr.bf16.mxu0 0
  %775 = vmatmul.mubr.bf16.gmra.mrb[0].mxu0 %v740
  %v776 = vpop.f32.mrb[0].mxu0
  %v777 = vadd.f32 %v721, %v776
  %v778 = vpop.f32.mrb[0].mxu0
  %v779 = vpop.f32.mrb[0].mxu0
  %v780 = vadd.f32 %v724, %v779
  %v781 = vpop.f32.mrb[0].mxu0
  %782 = vdwg.mxu0
  %v783 = vlaneseq
  %v784 = vshrl.u32 %v783, 7
  %v785 = vsub.s32 0, %v784
  %v786 = vrot.slane %v435, %v785
  %v787 = vadd.f32 %v777, %v786
  %v788 = vadd.f32 %v780, %v786
  %v789 = vmax.f32 %v787, 0.0
  %v790 = vmax.f32 %v788, 0.0
  %791 = vst.msk [vmem:[%s4] sm:$0xff] %vm63, %v789
  %792 = vst.msk [vmem:[%s4 + $0x8] sm:$0xff] %vm63, %v790
  // Predicated region
  $region18: #{gnn2_forward.1} parent=0 // pred_check
    _
  $region19: #{gnn2_forward.1} parent=0 // pred_check_branch
    %794 = sbr.rel (0) target = $region21
  $region20: #{gnn2_forward.1} parent=0 // pred_region
    _
  $region21: #{gnn2_forward.1} parent=0 // pred_fallthru
    _
  // Predicated region
  $region22: #{gnn2_forward.1} parent=0 // pred_check
    _
  $region23: #{gnn2_forward.1} parent=0 // pred_check_branch
    %796 = sbr.rel (0) target = $region25
  $region24: #{gnn2_forward.1} parent=0 // pred_region
    _
  $region25: #{gnn2_forward.1} parent=0 // pred_fallthru
    _

</llo_original>
